<compile_context>
chip_gen: v6e
topology: v6e:2x2x1
jax: 0.10.0
libtpu: 0.0.40
codegen_flags: <defaults>
</compile_context>

<pallas_src>
import jax
import jax.numpy as jnp
from jax.experimental import pallas as pl
from jax.experimental.pallas import tpu as pltpu


def _round_up(x, m):
    return ((x + m - 1) // m) * m


def mlp_kernel(x_ref,            # (TB, D_in)
               w0_ref, b0_ref,   # (D_in, H), (1, H)
               wh_ref, bh_ref,   # (5, H, H), (5, 1, H)  -- BN already folded in
               wc_ref, bc_ref,   # (H, N_pad), (1, N_pad) -- lane-dense classifier
               o_ref):           # (TB, N_pad)
    # Input layer.
    h = jnp.maximum(
        jnp.dot(x_ref[...], w0_ref[...], preferred_element_type=jnp.float32)
        + b0_ref[...], 0.0)

    # Five hidden (H,H) Linear+ReLU layers (static unroll; Dropout is identity
    # in eval mode and the eval-mode BatchNorm is folded into layer index 3).
    for k in range(wh_ref.shape[0]):
        h = jnp.maximum(
            jnp.dot(h, wh_ref[k], preferred_element_type=jnp.float32)
            + bh_ref[k], 0.0)

    # Classifier (no ReLU). Output is padded to a multiple of 128 lanes so the
    # store is unmasked / lane-dense; the wrapper slices off the padding.
    o_ref[...] = (jnp.dot(h, wc_ref[...], preferred_element_type=jnp.float32)
                  + bc_ref[...]).astype(o_ref.dtype)


def init_linear(key, in_dim, out_dim):
    """PyTorch nn.Linear default init: U(-1/sqrt(in), 1/sqrt(in))."""
    kw, kb = jax.random.split(key)
    bound = 1.0 / jnp.sqrt(jnp.float32(in_dim))
    w = jax.random.uniform(kw, (in_dim, out_dim), jnp.float32, -bound, bound)
    b = jax.random.uniform(kb, (1, out_dim), jnp.float32, -bound, bound)
    return w, b


def init_params(key, input_dim, hidden_dim, num_labels):
    keys = jax.random.split(key, 11)
    dims = [(input_dim, hidden_dim), (hidden_dim, hidden_dim),   # fc
            (hidden_dim, hidden_dim), (hidden_dim, hidden_dim),  # pred pre-BN
            (hidden_dim, hidden_dim), (hidden_dim, hidden_dim),  # pred post-BN
            (hidden_dim, num_labels)]                            # classifier
    linears = [init_linear(k, di, do) for k, (di, do) in zip(keys[:7], dims)]

    # Non-trivial eval-mode BatchNorm1d stats (so the BN-folding is actually
    # exercised by the correctness check).
    eps = 1e-5
    gamma = jax.random.uniform(keys[7], (1, hidden_dim), jnp.float32, 0.5, 1.5)
    beta = 0.1 * jax.random.normal(keys[8], (1, hidden_dim), jnp.float32)
    running_mean = 0.1 * jax.random.normal(keys[9], (1, hidden_dim), jnp.float32)
    running_var = jax.random.uniform(keys[10], (1, hidden_dim), jnp.float32, 0.5, 1.5)
    bn_scale = gamma / jnp.sqrt(running_var + eps)
    bn_shift = beta - running_mean * bn_scale
    return linears, (bn_scale, bn_shift)


def mlp_forward(x, linears, bn, *, block_batch=256, out_lane=128):
    bn_scale, bn_shift = bn
    (w0, b0), (w1, b1), (w2, b2), (w3, b3), (w4, b4), (w5, b5), (w6, b6) = linears
    H = w1.shape[0]

    # --- Fold eval-mode BatchNorm1d into the following Linear (exact). ---
    #   (h * s + t) @ W4 + b4 == h @ (diag(s) @ W4) + (t @ W4 + b4)
    w4f = bn_scale.reshape(H, 1) * w4
    b4f = b4 + bn_shift @ w4

    # Stack the five (H,H) hidden layers -> one weight DMA + one bias DMA.
    wh = jnp.stack([w1, w2, w3, w4f, w5])        # (5, H, H)
    bh = jnp.stack([b1, b2, b3, b4f, b5])        # (5, 1, H)

    # Zero-pad the classifier to a lane-dense (multiple of 128) output width.
    num_labels = w6.shape[1]
    n_pad = _round_up(max(num_labels, 1), out_lane)
    wc = jnp.zeros((H, n_pad), w6.dtype).at[:, :num_labels].set(w6)
    bc = jnp.zeros((1, n_pad), b6.dtype).at[:, :num_labels].set(b6)

    # Batch tiling: stream x/out over the grid, keep all weights resident.
    B, D = x.shape
    tb = min(_round_up(B, 8), block_batch)       # f32 sublane multiple
    b_pad = _round_up(B, tb)
    if b_pad != B:
        x = jnp.pad(x, ((0, b_pad - B), (0, 0)))
    grid = (b_pad // tb,)

    def const(nd):
        return lambda i: (0,) * nd

    out = pl.pallas_call(
        mlp_kernel,
        out_shape=jax.ShapeDtypeStruct((b_pad, n_pad), jnp.float32),
        grid=grid,
        in_specs=[
            pl.BlockSpec((tb, D), lambda i: (i, 0)),   # x: streamed per tile
            pl.BlockSpec(w0.shape, const(2)),          # weights: VMEM-resident
            pl.BlockSpec(b0.shape, const(2)),
            pl.BlockSpec(wh.shape, const(3)),
            pl.BlockSpec(bh.shape, const(3)),
            pl.BlockSpec(wc.shape, const(2)),
            pl.BlockSpec(bc.shape, const(2)),
        ],
        out_specs=pl.BlockSpec((tb, n_pad), lambda i: (i, 0)),
        compiler_params=pltpu.CompilerParams(
            dimension_semantics=("parallel",)),        # shard batch on v7x TCs
    )(x, w0, b0, wh, bh, wc, bc)

    return out[:B, :num_labels]


def mlp_reference(x, linears, bn):
    """Pure-JAX reference of the same forward pass (unfolded BN)."""
    bn_scale, bn_shift = bn
    h = x
    for w, b in linears[:4]:
        h = jnp.maximum(h @ w + b, 0.0)
    h = h * bn_scale + bn_shift                      # Dropout = identity (eval)
    for w, b in linears[4:6]:
        h = jnp.maximum(h @ w + b, 0.0)
    w, b = linears[6]
    return h @ w + b


if __name__ == "__main__":
    batch = 64
    input_dim = 16
    hidden_dim = 32
    num_labels = 4

    key = jax.random.PRNGKey(0)
    kx, kp = jax.random.split(key)
    x = jax.random.normal(kx, (batch, input_dim), jnp.float32)
    linears, bn = init_params(kp, input_dim, hidden_dim, num_labels)

    # block_batch=32 -> grid=(2,): exercises the batch-tiled pipeline.
    out = mlp_forward(x, linears, bn, block_batch=32)
    out = jax.block_until_ready(out)

    ref = mlp_reference(x, linears, bn)
    assert out.shape == (batch, num_labels)
    assert jnp.allclose(out, ref, atol=1e-4, rtol=1e-5), \
        float(jnp.max(jnp.abs(out - ref)))

    print("KERNEL_OK")
</pallas_src>

<mosaic_0001>
module attributes {stable_mosaic.version = 11 : i64} {
  func.func @mlp_kernel(%arg0: i32, %arg1: memref<32x16xf32, #tpu.memory_space<vmem>>, %arg2: memref<16x32xf32, #tpu.memory_space<vmem>>, %arg3: memref<1x32xf32, #tpu.memory_space<vmem>>, %arg4: memref<5x32x32xf32, #tpu.memory_space<vmem>>, %arg5: memref<5x1x32xf32, #tpu.memory_space<vmem>>, %arg6: memref<32x128xf32, #tpu.memory_space<vmem>>, %arg7: memref<1x128xf32, #tpu.memory_space<vmem>>, %arg8: memref<32x128xf32, #tpu.memory_space<vmem>>) attributes {dimension_semantics = [#tpu.dimension_semantics<parallel>], iteration_bounds = array<i64: 2>, scalar_prefetch = 0 : i64, scratch_operands = 0 : i64, tpu.core_type = #tpu.core_type<tc>, window_params = [{transform_indices = @transform_0, window_bounds = array<i64: 32, 16>}, {pipeline_mode = #tpu.pipeline_mode<synchronous>, transform_indices = @transform_1, window_bounds = array<i64: 16, 32>}, {pipeline_mode = #tpu.pipeline_mode<synchronous>, transform_indices = @transform_2, window_bounds = array<i64: 1, 32>}, {pipeline_mode = #tpu.pipeline_mode<synchronous>, transform_indices = @transform_3, window_bounds = array<i64: 5, 32, 32>}, {pipeline_mode = #tpu.pipeline_mode<synchronous>, transform_indices = @transform_4, window_bounds = array<i64: 5, 1, 32>}, {pipeline_mode = #tpu.pipeline_mode<synchronous>, transform_indices = @transform_5, window_bounds = array<i64: 32, 128>}, {pipeline_mode = #tpu.pipeline_mode<synchronous>, transform_indices = @transform_6, window_bounds = array<i64: 1, 128>}, {transform_indices = @transform_7, window_bounds = array<i64: 32, 128>}]} {
    %c0 = arith.constant 0 : index
    %c0_0 = arith.constant 0 : index
    %0 = vector.load %arg1[%c0, %c0_0] : memref<32x16xf32, #tpu.memory_space<vmem>>, vector<32x16xf32>
    %c0_1 = arith.constant 0 : index
    %c0_2 = arith.constant 0 : index
    %1 = vector.load %arg2[%c0_1, %c0_2] : memref<16x32xf32, #tpu.memory_space<vmem>>, vector<16x32xf32>
    %cst = arith.constant dense<0.000000e+00> : vector<32x32xf32>
    %2 = tpu.matmul %0, %1, %cst {dimension_numbers = #tpu.dot_dimension_numbers<[1], [0], [0], [1], [0, 0, 1, 1], [], []>} : vector<32x16xf32>, vector<16x32xf32>, vector<32x32xf32> -> vector<32x32xf32>
    %c0_3 = arith.constant 0 : index
    %c0_4 = arith.constant 0 : index
    %3 = vector.load %arg3[%c0_3, %c0_4] : memref<1x32xf32, #tpu.memory_space<vmem>>, vector<1x32xf32>
    %4 = vector.broadcast %3 : vector<1x32xf32> to vector<32x32xf32>
    %5 = arith.addf %2, %4 : vector<32x32xf32>
    %cst_5 = arith.constant 0.000000e+00 : f32
    %6 = vector.broadcast %cst_5 : f32 to vector<32x32xf32>
    %7 = arith.maximumf %5, %6 : vector<32x32xf32>
    %c0_6 = arith.constant 0 : index
    %c0_7 = arith.constant 0 : index
    %c0_8 = arith.constant 0 : index
    %8 = vector.load %arg4[%c0_6, %c0_7, %c0_8] : memref<5x32x32xf32, #tpu.memory_space<vmem>>, vector<1x32x32xf32>
    %9 = vector.shape_cast %8 : vector<1x32x32xf32> to vector<32x32xf32>
    %cst_9 = arith.constant dense<0.000000e+00> : vector<32x32xf32>
    %10 = tpu.matmul %7, %9, %cst_9 {dimension_numbers = #tpu.dot_dimension_numbers<[1], [0], [0], [1], [0, 0, 1, 1], [], []>} : vector<32x32xf32>, vector<32x32xf32>, vector<32x32xf32> -> vector<32x32xf32>
    %c0_10 = arith.constant 0 : index
    %c0_11 = arith.constant 0 : index
    %c0_12 = arith.constant 0 : index
    %11 = vector.load %arg5[%c0_10, %c0_11, %c0_12] : memref<5x1x32xf32, #tpu.memory_space<vmem>>, vector<1x1x32xf32>
    %12 = vector.shape_cast %11 : vector<1x1x32xf32> to vector<1x32xf32>
    %13 = vector.broadcast %12 : vector<1x32xf32> to vector<32x32xf32>
    %14 = arith.addf %10, %13 : vector<32x32xf32>
    %cst_13 = arith.constant 0.000000e+00 : f32
    %15 = vector.broadcast %cst_13 : f32 to vector<32x32xf32>
    %16 = arith.maximumf %14, %15 : vector<32x32xf32>
    %c1 = arith.constant 1 : index
    %c0_14 = arith.constant 0 : index
    %c0_15 = arith.constant 0 : index
    %17 = vector.load %arg4[%c1, %c0_14, %c0_15] : memref<5x32x32xf32, #tpu.memory_space<vmem>>, vector<1x32x32xf32>
    %18 = vector.shape_cast %17 : vector<1x32x32xf32> to vector<32x32xf32>
    %cst_16 = arith.constant dense<0.000000e+00> : vector<32x32xf32>
    %19 = tpu.matmul %16, %18, %cst_16 {dimension_numbers = #tpu.dot_dimension_numbers<[1], [0], [0], [1], [0, 0, 1, 1], [], []>} : vector<32x32xf32>, vector<32x32xf32>, vector<32x32xf32> -> vector<32x32xf32>
    %c1_17 = arith.constant 1 : index
    %c0_18 = arith.constant 0 : index
    %c0_19 = arith.constant 0 : index
    %20 = vector.load %arg5[%c1_17, %c0_18, %c0_19] : memref<5x1x32xf32, #tpu.memory_space<vmem>>, vector<1x1x32xf32>
    %21 = vector.shape_cast %20 : vector<1x1x32xf32> to vector<1x32xf32>
    %22 = vector.broadcast %21 : vector<1x32xf32> to vector<32x32xf32>
    %23 = arith.addf %19, %22 : vector<32x32xf32>
    %cst_20 = arith.constant 0.000000e+00 : f32
    %24 = vector.broadcast %cst_20 : f32 to vector<32x32xf32>
    %25 = arith.maximumf %23, %24 : vector<32x32xf32>
    %c2 = arith.constant 2 : index
    %c0_21 = arith.constant 0 : index
    %c0_22 = arith.constant 0 : index
    %26 = vector.load %arg4[%c2, %c0_21, %c0_22] : memref<5x32x32xf32, #tpu.memory_space<vmem>>, vector<1x32x32xf32>
    %27 = vector.shape_cast %26 : vector<1x32x32xf32> to vector<32x32xf32>
    %cst_23 = arith.constant dense<0.000000e+00> : vector<32x32xf32>
    %28 = tpu.matmul %25, %27, %cst_23 {dimension_numbers = #tpu.dot_dimension_numbers<[1], [0], [0], [1], [0, 0, 1, 1], [], []>} : vector<32x32xf32>, vector<32x32xf32>, vector<32x32xf32> -> vector<32x32xf32>
    %c2_24 = arith.constant 2 : index
    %c0_25 = arith.constant 0 : index
    %c0_26 = arith.constant 0 : index
    %29 = vector.load %arg5[%c2_24, %c0_25, %c0_26] : memref<5x1x32xf32, #tpu.memory_space<vmem>>, vector<1x1x32xf32>
    %30 = vector.shape_cast %29 : vector<1x1x32xf32> to vector<1x32xf32>
    %31 = vector.broadcast %30 : vector<1x32xf32> to vector<32x32xf32>
    %32 = arith.addf %28, %31 : vector<32x32xf32>
    %cst_27 = arith.constant 0.000000e+00 : f32
    %33 = vector.broadcast %cst_27 : f32 to vector<32x32xf32>
    %34 = arith.maximumf %32, %33 : vector<32x32xf32>
    %c3 = arith.constant 3 : index
    %c0_28 = arith.constant 0 : index
    %c0_29 = arith.constant 0 : index
    %35 = vector.load %arg4[%c3, %c0_28, %c0_29] : memref<5x32x32xf32, #tpu.memory_space<vmem>>, vector<1x32x32xf32>
    %36 = vector.shape_cast %35 : vector<1x32x32xf32> to vector<32x32xf32>
    %cst_30 = arith.constant dense<0.000000e+00> : vector<32x32xf32>
    %37 = tpu.matmul %34, %36, %cst_30 {dimension_numbers = #tpu.dot_dimension_numbers<[1], [0], [0], [1], [0, 0, 1, 1], [], []>} : vector<32x32xf32>, vector<32x32xf32>, vector<32x32xf32> -> vector<32x32xf32>
    %c3_31 = arith.constant 3 : index
    %c0_32 = arith.constant 0 : index
    %c0_33 = arith.constant 0 : index
    %38 = vector.load %arg5[%c3_31, %c0_32, %c0_33] : memref<5x1x32xf32, #tpu.memory_space<vmem>>, vector<1x1x32xf32>
    %39 = vector.shape_cast %38 : vector<1x1x32xf32> to vector<1x32xf32>
    %40 = vector.broadcast %39 : vector<1x32xf32> to vector<32x32xf32>
    %41 = arith.addf %37, %40 : vector<32x32xf32>
    %cst_34 = arith.constant 0.000000e+00 : f32
    %42 = vector.broadcast %cst_34 : f32 to vector<32x32xf32>
    %43 = arith.maximumf %41, %42 : vector<32x32xf32>
    %c4 = arith.constant 4 : index
    %c0_35 = arith.constant 0 : index
    %c0_36 = arith.constant 0 : index
    %44 = vector.load %arg4[%c4, %c0_35, %c0_36] : memref<5x32x32xf32, #tpu.memory_space<vmem>>, vector<1x32x32xf32>
    %45 = vector.shape_cast %44 : vector<1x32x32xf32> to vector<32x32xf32>
    %cst_37 = arith.constant dense<0.000000e+00> : vector<32x32xf32>
    %46 = tpu.matmul %43, %45, %cst_37 {dimension_numbers = #tpu.dot_dimension_numbers<[1], [0], [0], [1], [0, 0, 1, 1], [], []>} : vector<32x32xf32>, vector<32x32xf32>, vector<32x32xf32> -> vector<32x32xf32>
    %c4_38 = arith.constant 4 : index
    %c0_39 = arith.constant 0 : index
    %c0_40 = arith.constant 0 : index
    %47 = vector.load %arg5[%c4_38, %c0_39, %c0_40] : memref<5x1x32xf32, #tpu.memory_space<vmem>>, vector<1x1x32xf32>
    %48 = vector.shape_cast %47 : vector<1x1x32xf32> to vector<1x32xf32>
    %49 = vector.broadcast %48 : vector<1x32xf32> to vector<32x32xf32>
    %50 = arith.addf %46, %49 : vector<32x32xf32>
    %cst_41 = arith.constant 0.000000e+00 : f32
    %51 = vector.broadcast %cst_41 : f32 to vector<32x32xf32>
    %52 = arith.maximumf %50, %51 : vector<32x32xf32>
    %c0_42 = arith.constant 0 : index
    %c0_43 = arith.constant 0 : index
    %53 = vector.load %arg6[%c0_42, %c0_43] : memref<32x128xf32, #tpu.memory_space<vmem>>, vector<32x128xf32>
    %cst_44 = arith.constant dense<0.000000e+00> : vector<32x128xf32>
    %54 = tpu.matmul %52, %53, %cst_44 {dimension_numbers = #tpu.dot_dimension_numbers<[1], [0], [0], [1], [0, 0, 1, 1], [], []>} : vector<32x32xf32>, vector<32x128xf32>, vector<32x128xf32> -> vector<32x128xf32>
    %c0_45 = arith.constant 0 : index
    %c0_46 = arith.constant 0 : index
    %55 = vector.load %arg7[%c0_45, %c0_46] : memref<1x128xf32, #tpu.memory_space<vmem>>, vector<1x128xf32>
    %56 = vector.broadcast %55 : vector<1x128xf32> to vector<32x128xf32>
    %57 = arith.addf %54, %56 : vector<32x128xf32>
    %c0_47 = arith.constant 0 : index
    %c0_48 = arith.constant 0 : index
    %58 = vector.load %arg8[%c0_47, %c0_48] : memref<32x128xf32, #tpu.memory_space<vmem>>, vector<32x128xf32>
    tpu.vector_store %arg8[%c0_47, %c0_48], %57 {strides = array<i32>} : memref<32x128xf32, #tpu.memory_space<vmem>>, vector<32x128xf32>,
    return
  }
  func.func @transform_0(%arg0: i32) -> (i32, i32) {
    %c0_i32 = arith.constant 0 : i32
    %c0_i32_0 = arith.constant 0 : i32
    return %arg0, %c0_i32 : i32, i32
  }
  func.func @transform_1(%arg0: i32) -> (i32, i32) {
    %c0_i32 = arith.constant 0 : i32
    %c0_i32_0 = arith.constant 0 : i32
    %c0_i32_1 = arith.constant 0 : i32
    return %c0_i32, %c0_i32_0 : i32, i32
  }
  func.func @transform_2(%arg0: i32) -> (i32, i32) {
    %c0_i32 = arith.constant 0 : i32
    %c0_i32_0 = arith.constant 0 : i32
    %c0_i32_1 = arith.constant 0 : i32
    return %c0_i32, %c0_i32_0 : i32, i32
  }
  func.func @transform_3(%arg0: i32) -> (i32, i32, i32) {
    %c0_i32 = arith.constant 0 : i32
    %c0_i32_0 = arith.constant 0 : i32
    %c0_i32_1 = arith.constant 0 : i32
    %c0_i32_2 = arith.constant 0 : i32
    return %c0_i32, %c0_i32_0, %c0_i32_1 : i32, i32, i32
  }
  func.func @transform_4(%arg0: i32) -> (i32, i32, i32) {
    %c0_i32 = arith.constant 0 : i32
    %c0_i32_0 = arith.constant 0 : i32
    %c0_i32_1 = arith.constant 0 : i32
    %c0_i32_2 = arith.constant 0 : i32
    return %c0_i32, %c0_i32_0, %c0_i32_1 : i32, i32, i32
  }
  func.func @transform_5(%arg0: i32) -> (i32, i32) {
    %c0_i32 = arith.constant 0 : i32
    %c0_i32_0 = arith.constant 0 : i32
    %c0_i32_1 = arith.constant 0 : i32
    return %c0_i32, %c0_i32_0 : i32, i32
  }
  func.func @transform_6(%arg0: i32) -> (i32, i32) {
    %c0_i32 = arith.constant 0 : i32
    %c0_i32_0 = arith.constant 0 : i32
    %c0_i32_1 = arith.constant 0 : i32
    return %c0_i32, %c0_i32_0 : i32, i32
  }
  func.func @transform_7(%arg0: i32) -> (i32, i32) {
    %c0_i32 = arith.constant 0 : i32
    %c0_i32_0 = arith.constant 0 : i32
    return %arg0, %c0_i32 : i32, i32
  }
}

</mosaic_0001>

<llo_original>
// kernel: tpu_custom_call.1
$region0: #{tpu_custom_call.1}
  #allocation0 [shape = 'u32[]', space=smem, size = 0x4, offset = 0x4, fixed_abs, tag = 'smem constant byte address 0x4 - core index']
  #allocation1 [shape = 'u32[144,128]{1,0:T(1,128)}', space=vmem, size = 0x12000, scoped, tag = 'internal scratch']
  %s0 = inlined_call_operand.vmem [shape: f32[64,16], index: 0, kind: input, shape index: {}]
  %s1 = inlined_call_operand.vmem [shape: f32[16,32], index: 1, kind: input, shape index: {}]
  %s2 = inlined_call_operand.vmem [shape: f32[1,32], index: 2, kind: input, shape index: {}]
  %s3 = inlined_call_operand.hbm [shape: f32[5,32,32], index: 3, kind: input, shape index: {}]
  %s4 = inlined_call_operand.vmem [shape: f32[5,1,32], index: 4, kind: input, shape index: {}]
  %s5 = inlined_call_operand.vmem [shape: f32[32,128], index: 5, kind: input, shape index: {}]
  %s6 = inlined_call_operand.vmem [shape: f32[1,128], index: 6, kind: input, shape index: {}]
  %s7 = inlined_call_operand.hbm [shape: f32[64,128], index: 7, kind: output, shape index: {}]
  %s8 = sld [smem:[#allocation0]]
  $region65: #{tpu_custom_call.1} parent=0
    _
  %s10 = ssub.s32 1, %s8
  %s11 = scalar_select 0, %s10, %s8
  $region1: #{tpu_custom_call.1} parent=0
    #allocation2 [shape = 'u8[81920]{0}', space=vmem, size = 0x14000, scoped, tag = 'input window, operand 3, single buffered']
    #allocation3 [shape = 's32[2]{0}', space=sflag, size = 0x8, scoped, tag = 'scoped memory for tpu_custom_call.1']
    #allocation4 [shape = 's32[2]{0}', space=sflag, size = 0x8, scoped, tag = 'scoped memory for tpu_custom_call.1']
    #allocation5 [shape = 'u8[32768]{0}', space=vmem, size = 0x8000, scoped, tag = 'output window, operand 0']
    %12 = vsyncpa [#allocation3], 0
    %13 = vsyncpa [#allocation4], 0
    %s14 = scalar_lea.sflag [#allocation4], 1
    %15 = vsyncpa %s14, 0
    loop: start=0, step=1, limit=4
    $region2: #{tpu_custom_call.1} parent=1 // loop_pre_header
      _
    $region3: #{tpu_custom_call.1} parent=1 // loop_header
      %s17 = sphi 0, %s21
      %p18 = scmp.ge.s32.totalorder %s17, 4
      %s27 = sphi 0, %s29
      %s30 = sphi 0, %s27
      %s31 = sphi 0, %s30
      %s47 = sphi 0, %s31
      %s51 = sphi 0, %s51
      %s53 = sphi 0, %s51
      %s54 = sphi 0, %s53
      %s68 = sphi 0, %s54
      %s72 = sphi 0, %s72
      %s74 = sphi 0, %s72
      %s75 = sphi 0, %s74
      %s89 = sphi 0, %s75
      %s93 = sphi 0, %s93
      %s95 = sphi 0, %s93
      %s96 = sphi 0, %s95
      %s110 = sphi 0, %s96
      %s114 = sphi 0, %s114
      %s116 = sphi 0, %s114
      %s117 = sphi 0, %s116
      %s131 = sphi 0, %s117
      %s135 = sphi 0, %s135
      %s137 = sphi 0, %s135
      %s138 = sphi 0, %s137
      %s152 = sphi 0, %s138
      %s156 = sphi 0, %s156
      %s158 = sphi 0, %s156
      %s159 = sphi 0, %s158
      %s173 = sphi 0, %s159
      %s179 = sphi 0, %s181
      %s182 = sphi 0, %s179
      %s183 = sphi 0, %s182
      %s199 = sphi 0, %s183
    $region4: #{tpu_custom_call.1} parent=1 // loop_header_branch
      %20 = sbr.rel (%p18) target = $region8
    $region5: #{tpu_custom_call.1} parent=1 // loop_body
      %s22 = ssub.s32 %s17, 1
      %s23 = ssub.s32 %s17, 2
      %s24 = sadd.s32 %s17, 1
      %s25 = ssub.s32 %s17, %s24
      %p26 = scmp.eq.s32.totalorder %s25, 0
      %s28 = sadd.s32 %s27, 1
      %s29 = scalar_select %p26, %s27, %s28
      %p32 = pneg %p26
      %p33 = scmp.eq.s32.totalorder %s17, 1
      %p34 = por %p32, %p33
      %p35 = scmp.ne.s32.totalorder %s27, %s30
      %p36 = scmp.eq.s32.totalorder %s17, 0
      %p37 = por %p35, %p36
      %p38 = scmp.ne.s32.totalorder %s27, %s30
      %p39 = scmp.eq.s32.totalorder %s22, 1
      %p40 = por %p38, %p39
      %p41 = scmp.ne.s32.totalorder %s30, %s31
      %p42 = scmp.eq.s32.totalorder %s22, 0
      %p43 = por %p41, %p42
      %p44 = scmp.ne.s32.totalorder %s30, %s31
      %p45 = scmp.eq.s32.totalorder %s23, 1
      %p46 = por %p44, %p45
      %p48 = scmp.ne.s32.totalorder %s31, %s47
      %p49 = scmp.eq.s32.totalorder %s23, 0
      %p50 = por %p48, %p49
      %s52 = sadd.s32 %s51, 1
      %p55 = scmp.eq.s32.totalorder %s17, 1
      %p56 = scmp.ne.s32.totalorder %s51, %s53
      %p57 = scmp.eq.s32.totalorder %s17, 0
      %p58 = por %p56, %p57
      %p59 = scmp.ne.s32.totalorder %s51, %s53
      %p60 = scmp.eq.s32.totalorder %s22, 1
      %p61 = por %p59, %p60
      %p62 = scmp.ne.s32.totalorder %s53, %s54
      %p63 = scmp.eq.s32.totalorder %s22, 0
      %p64 = por %p62, %p63
      %p65 = scmp.ne.s32.totalorder %s53, %s54
      %p66 = scmp.eq.s32.totalorder %s23, 1
      %p67 = por %p65, %p66
      %p69 = scmp.ne.s32.totalorder %s54, %s68
      %p70 = scmp.eq.s32.totalorder %s23, 0
      %p71 = por %p69, %p70
      %s73 = sadd.s32 %s72, 1
      %p76 = scmp.eq.s32.totalorder %s17, 1
      %p77 = scmp.ne.s32.totalorder %s72, %s74
      %p78 = scmp.eq.s32.totalorder %s17, 0
      %p79 = por %p77, %p78
      %p80 = scmp.ne.s32.totalorder %s72, %s74
      %p81 = scmp.eq.s32.totalorder %s22, 1
      %p82 = por %p80, %p81
      %p83 = scmp.ne.s32.totalorder %s74, %s75
      %p84 = scmp.eq.s32.totalorder %s22, 0
      %p85 = por %p83, %p84
      %p86 = scmp.ne.s32.totalorder %s74, %s75
      %p87 = scmp.eq.s32.totalorder %s23, 1
      %p88 = por %p86, %p87
      %p90 = scmp.ne.s32.totalorder %s75, %s89
      %p91 = scmp.eq.s32.totalorder %s23, 0
      %p92 = por %p90, %p91
      %s94 = sadd.s32 %s93, 1
      %p97 = scmp.eq.s32.totalorder %s17, 1
      %p98 = scmp.ne.s32.totalorder %s93, %s95
      %p99 = scmp.eq.s32.totalorder %s17, 0
      %p100 = por %p98, %p99
      %p101 = scmp.ne.s32.totalorder %s93, %s95
      %p102 = scmp.eq.s32.totalorder %s22, 1
      %p103 = por %p101, %p102
      %p104 = scmp.ne.s32.totalorder %s95, %s96
      %p105 = scmp.eq.s32.totalorder %s22, 0
      %p106 = por %p104, %p105
      %p107 = scmp.ne.s32.totalorder %s95, %s96
      %p108 = scmp.eq.s32.totalorder %s23, 1
      %p109 = por %p107, %p108
      %p111 = scmp.ne.s32.totalorder %s96, %s110
      %p112 = scmp.eq.s32.totalorder %s23, 0
      %p113 = por %p111, %p112
      %s115 = sadd.s32 %s114, 1
      %p118 = scmp.eq.s32.totalorder %s17, 1
      %p119 = scmp.ne.s32.totalorder %s114, %s116
      %p120 = scmp.eq.s32.totalorder %s17, 0
      %p121 = por %p119, %p120
      %p122 = scmp.ne.s32.totalorder %s114, %s116
      %p123 = scmp.eq.s32.totalorder %s22, 1
      %p124 = por %p122, %p123
      %p125 = scmp.ne.s32.totalorder %s116, %s117
      %p126 = scmp.eq.s32.totalorder %s22, 0
      %p127 = por %p125, %p126
      %p128 = scmp.ne.s32.totalorder %s116, %s117
      %p129 = scmp.eq.s32.totalorder %s23, 1
      %p130 = por %p128, %p129
      %p132 = scmp.ne.s32.totalorder %s117, %s131
      %p133 = scmp.eq.s32.totalorder %s23, 0
      %p134 = por %p132, %p133
      %s136 = sadd.s32 %s135, 1
      %p139 = scmp.eq.s32.totalorder %s17, 1
      %p140 = scmp.ne.s32.totalorder %s135, %s137
      %p141 = scmp.eq.s32.totalorder %s17, 0
      %p142 = por %p140, %p141
      %p143 = scmp.ne.s32.totalorder %s135, %s137
      %p144 = scmp.eq.s32.totalorder %s22, 1
      %p145 = por %p143, %p144
      %p146 = scmp.ne.s32.totalorder %s137, %s138
      %p147 = scmp.eq.s32.totalorder %s22, 0
      %p148 = por %p146, %p147
      %p149 = scmp.ne.s32.totalorder %s137, %s138
      %p150 = scmp.eq.s32.totalorder %s23, 1
      %p151 = por %p149, %p150
      %p153 = scmp.ne.s32.totalorder %s138, %s152
      %p154 = scmp.eq.s32.totalorder %s23, 0
      %p155 = por %p153, %p154
      %s157 = sadd.s32 %s156, 1
      %p160 = scmp.eq.s32.totalorder %s17, 1
      %p161 = scmp.ne.s32.totalorder %s156, %s158
      %p162 = scmp.eq.s32.totalorder %s17, 0
      %p163 = por %p161, %p162
      %p164 = scmp.ne.s32.totalorder %s156, %s158
      %p165 = scmp.eq.s32.totalorder %s22, 1
      %p166 = por %p164, %p165
      %p167 = scmp.ne.s32.totalorder %s158, %s159
      %p168 = scmp.eq.s32.totalorder %s22, 0
      %p169 = por %p167, %p168
      %p170 = scmp.ne.s32.totalorder %s158, %s159
      %p171 = scmp.eq.s32.totalorder %s23, 1
      %p172 = por %p170, %p171
      %p174 = scmp.ne.s32.totalorder %s159, %s173
      %p175 = scmp.eq.s32.totalorder %s23, 0
      %p176 = por %p174, %p175
      %s177 = ssub.s32 %s17, %s24
      %p178 = scmp.eq.s32.totalorder %s177, 0
      %s180 = sadd.s32 %s179, 1
      %s181 = scalar_select %p178, %s179, %s180
      %p184 = pneg %p178
      %p185 = scmp.eq.s32.totalorder %s17, 1
      %p186 = por %p184, %p185
      %p187 = scmp.ne.s32.totalorder %s179, %s182
      %p188 = scmp.eq.s32.totalorder %s17, 0
      %p189 = por %p187, %p188
      %p190 = scmp.ne.s32.totalorder %s179, %s182
      %p191 = scmp.eq.s32.totalorder %s22, 1
      %p192 = por %p190, %p191
      %p193 = scmp.ne.s32.totalorder %s182, %s183
      %p194 = scmp.eq.s32.totalorder %s22, 0
      %p195 = por %p193, %p194
      %p196 = scmp.ne.s32.totalorder %s182, %s183
      %p197 = scmp.eq.s32.totalorder %s23, 1
      %p198 = por %p196, %p197
      %p200 = scmp.ne.s32.totalorder %s183, %s199
      %p201 = scmp.eq.s32.totalorder %s23, 0
      %p202 = por %p200, %p201
      %p203 = scmp.le.s32.totalorder 1, %s17
      %p204 = scmp.lt.s32.totalorder %s17, 3
      %p205 = pnand %p203, %p204
      %p206 = pneg %p205
      // Predicated region
      $region9: #{tpu_custom_call.1} parent=5 // pred_check
        _
      $region10: #{tpu_custom_call.1} parent=5 // pred_check_branch
        %208 = sbr.rel (%p205) target = $region12
      $region11: #{tpu_custom_call.1} parent=5 // pred_region
        %s209 = ssub.s32 %s17, 1
        // Predicated region
        $region13: #{tpu_custom_call.1} parent=11 // pred_check
          %p210 = pneg %p64
        $region14: #{tpu_custom_call.1} parent=11 // pred_check_branch
          %212 = sbr.rel (%p210) target = $region16
        $region15: #{tpu_custom_call.1} parent=11 // pred_region
          _
        $region16: #{tpu_custom_call.1} parent=11 // pred_fallthru
          _
        // Predicated region
        $region17: #{tpu_custom_call.1} parent=11 // pred_check
          %p213 = pneg %p85
        $region18: #{tpu_custom_call.1} parent=11 // pred_check_branch
          %215 = sbr.rel (%p213) target = $region20
        $region19: #{tpu_custom_call.1} parent=11 // pred_region
          _
        $region20: #{tpu_custom_call.1} parent=11 // pred_fallthru
          _
        // Predicated region
        $region21: #{tpu_custom_call.1} parent=11 // pred_check
          %p216 = pneg %p106
        $region22: #{tpu_custom_call.1} parent=11 // pred_check_branch
          %218 = sbr.rel (%p216) target = $region24
        $region23: #{tpu_custom_call.1} parent=11 // pred_region
          %s220 = ssub.s32 2560, 2560
          %221 = vsyncadd [#allocation3], %s220
          %s222 = sshll.u32 [#allocation2], 4
          %s223 = int_to_ptr.vmem [resolvable:$true] %s222
          %228 = dma.hbm_to_vmem [thread:$0]  %s3, 2560, %s223, [#allocation3], 128, 128, 8
        $region24: #{tpu_custom_call.1} parent=11 // pred_fallthru
          _
        // Predicated region
        $region25: #{tpu_custom_call.1} parent=11 // pred_check
          %p229 = pneg %p127
        $region26: #{tpu_custom_call.1} parent=11 // pred_check_branch
          %231 = sbr.rel (%p229) target = $region28
        $region27: #{tpu_custom_call.1} parent=11 // pred_region
          _
        $region28: #{tpu_custom_call.1} parent=11 // pred_fallthru
          _
        // Predicated region
        $region29: #{tpu_custom_call.1} parent=11 // pred_check
          %p232 = pneg %p148
        $region30: #{tpu_custom_call.1} parent=11 // pred_check_branch
          %234 = sbr.rel (%p232) target = $region32
        $region31: #{tpu_custom_call.1} parent=11 // pred_region
          _
        $region32: #{tpu_custom_call.1} parent=11 // pred_fallthru
          _
        // Predicated region
        $region33: #{tpu_custom_call.1} parent=11 // pred_check
          %p235 = pneg %p169
        $region34: #{tpu_custom_call.1} parent=11 // pred_check_branch
          %237 = sbr.rel (%p235) target = $region36
        $region35: #{tpu_custom_call.1} parent=11 // pred_region
          _
        $region36: #{tpu_custom_call.1} parent=11 // pred_fallthru
          _
      $region12: #{tpu_custom_call.1} parent=5 // pred_fallthru
        _
      %p238 = scmp.lt.s32.totalorder %s17, 2
      // Predicated region
      $region37: #{tpu_custom_call.1} parent=5 // pred_check
        %p239 = pneg %p238
      $region38: #{tpu_custom_call.1} parent=5 // pred_check_branch
        %241 = sbr.rel (%p239) target = $region40
      $region39: #{tpu_custom_call.1} parent=5 // pred_region
        // Predicated region
        $region41: #{tpu_custom_call.1} parent=39 // pred_check
          %p242 = pneg %p37
        $region42: #{tpu_custom_call.1} parent=39 // pred_check_branch
          %244 = sbr.rel (%p242) target = $region44
        $region43: #{tpu_custom_call.1} parent=39 // pred_region
          %s245 = smul.u32 4, %s17
          %p246 = scmp.lt.s32.totalorder %s245, 7
          %s247 = scalar_select %p246, %s245, 7
          %s248 = smul.addr %s247, 8
          %s249 = scalar_lea.vmem %s0, %s248
          %s250 = smul.u32 4, %s17
        $region44: #{tpu_custom_call.1} parent=39 // pred_fallthru
          _
      $region40: #{tpu_custom_call.1} parent=5 // pred_fallthru
        _
      %p251 = scmp.le.s32.totalorder 1, %s17
      %p252 = scmp.lt.s32.totalorder %s17, 3
      %p253 = pnand %p251, %p252
      %p254 = pneg %p253
      // Predicated region
      $region45: #{tpu_custom_call.1} parent=5 // pred_check
        _
      $region46: #{tpu_custom_call.1} parent=5 // pred_check_branch
        %256 = sbr.rel (%p253) target = $region48
      $region47: #{tpu_custom_call.1} parent=5 // pred_region
        %s257 = ssub.s32 %s17, 1
        // Predicated region
        $region49: #{tpu_custom_call.1} parent=47 // pred_check
          %p258 = pneg %p106
        $region50: #{tpu_custom_call.1} parent=47 // pred_check_branch
          %260 = sbr.rel (%p258) target = $region52
        $region51: #{tpu_custom_call.1} parent=47 // pred_region
          %261 = dma.done [#allocation3], 2560
        $region52: #{tpu_custom_call.1} parent=47 // pred_fallthru
          _
        %s262 = smul.u32 4, %s22
        %p263 = scmp.lt.s32.totalorder %s262, 7
        %s264 = scalar_select %p263, %s262, 7
        %s265 = smul.addr %s264, 8
        %s266 = scalar_lea.vmem %s0, %s265
        %p267 = pneg %p43
        %p268 = pneg %p40
        %p269 = pneg %p64
        %p270 = pneg %p61
        %p271 = pneg %p85
        %p272 = pneg %p82
        %p273 = pneg %p106
        %p274 = pneg %p103
        %p275 = pneg %p127
        %p276 = pneg %p124
        %p277 = pneg %p148
        %p278 = pneg %p145
        %p279 = pneg %p169
        %p280 = pneg %p166
        %p281 = pneg %p195
        %p282 = pneg %p192
        %s283 = sand.u32 %s182, 1
        %s284 = scalar_lea.sflag [#allocation4], %s283
        %s285 = sand.u32 %s182, 1
        %s286 = smul.addr %s285, 32
        %s287 = scalar_lea.vmem [#allocation5], %s286
        %s288 = smul.u32 4, %s22
        %p289 = scmp.lt.s32.totalorder %s288, 7
        %s290 = scalar_select %p289, %s288, 7
        %s291 = smul.addr %s290, 8
        %s292 = scalar_lea.vmem %s0, %s291
        %s293 = smul.u32 4, %s22
        %s294 = smul.u32 4, %s22
        %v295 = vld [vmem:[%s292] sm:$0xff]
        %v296 = vld [vmem:[%s292 + $0x8] sm:$0xff]
        %v297 = vld [vmem:[%s292 + $0x10] sm:$0xff]
        %v298 = vld [vmem:[%s292 + $0x18] sm:$0xff]
        %v299 = vld [vmem:[%s1] sm:$0xff]
        %v300 = vld [vmem:[%s1 + $0x8] sm:$0xff]
        %v301 = vld [vmem:[%s2] sm:$0x1]
        %v303 = vlaneseq
        %v304 = vshrl.u32 %v303, 7
        %v305 = vsub.s32 0, %v304
        %v306 = vrot.slane %v301, %v305
        %vm308 = vcmask 130048
        %v310 = vsel %vm308, %v295, 0
        %v313 = vsel %vm308, %v296, 0
        %v316 = vsel %vm308, %v297, 0
        %v319 = vsel %vm308, %v298, 0
        %321 = vmatprep.subr.mxu0 0.0
        %322 = vmatpush1.msra.mxu0 0.0
        %323 = vmatprep.subr.mxu0 0.0
        %324 = vmatpush1.msra.mxu0 0.0
        %325 = vmatprep.subr.mxu0 0.0
        %326 = vmatpush1.msra.mxu0 0.0
        %327 = vmatprep.subr.mxu0 0.0
        %328 = vmatpush1.msra.mxu0 0.0
        %329 = vmatprep.subr.mxu0 0.0
        %330 = vmatpush1.msra.mxu0 0.0
        %331 = vmatprep.subr.mxu0 0.0
        %332 = vmatpush1.msra.mxu0 0.0
        %333 = vmatprep.subr.mxu0 0.0
        %334 = vmatpush1.msra.mxu0 0.0
        %335 = vmatprep.subr.mxu0 0.0
        %336 = vmatpush1.msra.mxu0 0.0
        %337 = vmatprep.subr.mxu0 0.0
        %338 = vmatpush1.msra.mxu0 0.0
        %339 = vmatprep.subr.mxu0 0.0
        %340 = vmatpush1.msra.mxu0 0.0
        %341 = vmatprep.subr.mxu0 0.0
        %342 = vmatpush1.msra.mxu0 0.0
        %343 = vmatprep.subr.mxu0 0.0
        %344 = vmatpush1.msra.mxu0 0.0
        %345 = vmatprep.subr.mxu0 0.0
        %346 = vmatpush1.msra.mxu0 0.0
        %347 = vmatprep.subr.mxu0 0.0
        %348 = vmatpush1.msra.mxu0 0.0
        %349 = vmatprep.subr.mxu0 0.0
        %350 = vmatpush1.msra.mxu0 %v300
        %351 = vmatprep.subr.mxu0 0.0
        %352 = vmatpush1.msra.mxu0 %v299
        %353 = vmatprep.subr.mxu0 0.0
        %354 = vmatpush2.msra.mxu0 0.0
        %355 = vmatprep.subr.mxu0 0.0
        %356 = vmatpush2.msra.mxu0 0.0
        %357 = vmatprep.subr.mxu0 0.0
        %358 = vmatpush2.msra.mxu0 0.0
        %359 = vmatprep.subr.mxu0 0.0
        %360 = vmatpush2.msra.mxu0 0.0
        %361 = vmatprep.subr.mxu0 0.0
        %362 = vmatpush2.msra.mxu0 0.0
        %363 = vmatprep.subr.mxu0 0.0
        %364 = vmatpush2.msra.mxu0 0.0
        %365 = vmatprep.subr.mxu0 0.0
        %366 = vmatpush2.msra.mxu0 0.0
        %367 = vmatprep.subr.mxu0 0.0
        %368 = vmatpush2.msra.mxu0 0.0
        %369 = vmatprep.subr.mxu0 0.0
        %370 = vmatpush2.msra.mxu0 0.0
        %371 = vmatprep.subr.mxu0 0.0
        %372 = vmatpush2.msra.mxu0 0.0
        %373 = vmatprep.subr.mxu0 0.0
        %374 = vmatpush2.msra.mxu0 0.0
        %375 = vmatprep.subr.mxu0 0.0
        %376 = vmatpush2.msra.mxu0 0.0
        %377 = vmatprep.subr.mxu0 0.0
        %378 = vmatpush2.msra.mxu0 0.0
        %379 = vmatprep.subr.mxu0 0.0
        %380 = vmatpush2.msra.mxu0 0.0
        %381 = vmatprep.subr.mxu0 0.0
        %382 = vmatpush2.msra.mxu0 0.0
        %383 = vmatprep.subr.mxu0 0.0
        %384 = vmatpush2.msra.mxu0 0.0
        %385 = vmatprep.mubr.f32.mxu0 0.0
        %386 = vmatmul.mubr.f32.gmra.mxu0 %v310
        %v387 = vpop.f32.mrf.mxu0
        %v388 = vadd.f32 %v306, %v387
        %v389 = vpop.f32.mrf.mxu0
        %390 = vmatprep.mubr.f32.mxu0 0.0
        %391 = vmatmul.mubr.f32.gmra.mxu0 %v313
        %v392 = vpop.f32.mrf.mxu0
        %v393 = vadd.f32 %v306, %v392
        %v394 = vpop.f32.mrf.mxu0
        %395 = vmatprep.mubr.f32.mxu0 0.0
        %396 = vmatmul.mubr.f32.gmra.mxu0 %v316
        %v397 = vpop.f32.mrf.mxu0
        %v398 = vadd.f32 %v306, %v397
        %v399 = vpop.f32.mrf.mxu0
        %400 = vmatprep.mubr.f32.mxu0 0.0
        %401 = vmatmul.mubr.f32.gmra.mxu0 %v319
        %v402 = vpop.f32.mrf.mxu0
        %v403 = vadd.f32 %v306, %v402
        %v404 = vpop.f32.mrf.mxu0
        %405 = vdwg.mxu0
        %v406 = vmax.f32 %v388, 0.0
        %v407 = vmax.f32 %v393, 0.0
        %v408 = vmax.f32 %v398, 0.0
        %v409 = vmax.f32 %v403, 0.0
        %v410 = vld [vmem:[#allocation2] sm:$0xff]
        %v411 = vld [vmem:[#allocation2 + $0x8] sm:$0xff]
        %v412 = vld [vmem:[#allocation2 + $0x10] sm:$0xff]
        %v413 = vld [vmem:[#allocation2 + $0x18] sm:$0xff]
        %v414 = vld [vmem:[%s4] sm:$0x1]
        %v416 = vlaneseq
        %v417 = vshrl.u32 %v416, 7
        %v418 = vsub.s32 0, %v417
        %v419 = vrot.slane %v414, %v418
        %vm421 = vcmask 261120
        %v423 = vsel %vm421, %v406, 0
        %v426 = vsel %vm421, %v407, 0
        %v429 = vsel %vm421, %v408, 0
        %v432 = vsel %vm421, %v409, 0
        %434 = vmatprep.subr.mxu0 0.0
        %435 = vmatpush1.msra.mxu0 0.0
        %436 = vmatprep.subr.mxu0 0.0
        %437 = vmatpush1.msra.mxu0 0.0
        %438 = vmatprep.subr.mxu0 0.0
        %439 = vmatpush1.msra.mxu0 0.0
        %440 = vmatprep.subr.mxu0 0.0
        %441 = vmatpush1.msra.mxu0 0.0
        %442 = vmatprep.subr.mxu0 0.0
        %443 = vmatpush1.msra.mxu0 0.0
        %444 = vmatprep.subr.mxu0 0.0
        %445 = vmatpush1.msra.mxu0 0.0
        %446 = vmatprep.subr.mxu0 0.0
        %447 = vmatpush1.msra.mxu0 0.0
        %448 = vmatprep.subr.mxu0 0.0
        %449 = vmatpush1.msra.mxu0 0.0
        %450 = vmatprep.subr.mxu0 0.0
        %451 = vmatpush1.msra.mxu0 0.0
        %452 = vmatprep.subr.mxu0 0.0
        %453 = vmatpush1.msra.mxu0 0.0
        %454 = vmatprep.subr.mxu0 0.0
        %455 = vmatpush1.msra.mxu0 0.0
        %456 = vmatprep.subr.mxu0 0.0
        %457 = vmatpush1.msra.mxu0 0.0
        %458 = vmatprep.subr.mxu0 0.0
        %459 = vmatpush1.msra.mxu0 %v413
        %460 = vmatprep.subr.mxu0 0.0
        %461 = vmatpush1.msra.mxu0 %v412
        %462 = vmatprep.subr.mxu0 0.0
        %463 = vmatpush1.msra.mxu0 %v411
        %464 = vmatprep.subr.mxu0 0.0
        %465 = vmatpush1.msra.mxu0 %v410
        %466 = vmatprep.subr.mxu0 0.0
        %467 = vmatpush2.msra.mxu0 0.0
        %468 = vmatprep.subr.mxu0 0.0
        %469 = vmatpush2.msra.mxu0 0.0
        %470 = vmatprep.subr.mxu0 0.0
        %471 = vmatpush2.msra.mxu0 0.0
        %472 = vmatprep.subr.mxu0 0.0
        %473 = vmatpush2.msra.mxu0 0.0
        %474 = vmatprep.subr.mxu0 0.0
        %475 = vmatpush2.msra.mxu0 0.0
        %476 = vmatprep.subr.mxu0 0.0
        %477 = vmatpush2.msra.mxu0 0.0
        %478 = vmatprep.subr.mxu0 0.0
        %479 = vmatpush2.msra.mxu0 0.0
        %480 = vmatprep.subr.mxu0 0.0
        %481 = vmatpush2.msra.mxu0 0.0
        %482 = vmatprep.subr.mxu0 0.0
        %483 = vmatpush2.msra.mxu0 0.0
        %484 = vmatprep.subr.mxu0 0.0
        %485 = vmatpush2.msra.mxu0 0.0
        %486 = vmatprep.subr.mxu0 0.0
        %487 = vmatpush2.msra.mxu0 0.0
        %488 = vmatprep.subr.mxu0 0.0
        %489 = vmatpush2.msra.mxu0 0.0
        %490 = vmatprep.subr.mxu0 0.0
        %491 = vmatpush2.msra.mxu0 0.0
        %492 = vmatprep.subr.mxu0 0.0
        %493 = vmatpush2.msra.mxu0 0.0
        %494 = vmatprep.subr.mxu0 0.0
        %495 = vmatpush2.msra.mxu0 0.0
        %496 = vmatprep.subr.mxu0 0.0
        %497 = vmatpush2.msra.mxu0 0.0
        %498 = vmatprep.mubr.f32.mxu0 0.0
        %499 = vmatmul.mubr.f32.gmra.mxu0 %v423
        %v500 = vpop.f32.mrf.mxu0
        %v501 = vadd.f32 %v419, %v500
        %v502 = vpop.f32.mrf.mxu0
        %503 = vmatprep.mubr.f32.mxu0 0.0
        %504 = vmatmul.mubr.f32.gmra.mxu0 %v426
        %v505 = vpop.f32.mrf.mxu0
        %v506 = vadd.f32 %v419, %v505
        %v507 = vpop.f32.mrf.mxu0
        %508 = vmatprep.mubr.f32.mxu0 0.0
        %509 = vmatmul.mubr.f32.gmra.mxu0 %v429
        %v510 = vpop.f32.mrf.mxu0
        %v511 = vadd.f32 %v419, %v510
        %v512 = vpop.f32.mrf.mxu0
        %513 = vmatprep.mubr.f32.mxu0 0.0
        %514 = vmatmul.mubr.f32.gmra.mxu0 %v432
        %v515 = vpop.f32.mrf.mxu0
        %v516 = vadd.f32 %v419, %v515
        %v517 = vpop.f32.mrf.mxu0
        %518 = vdwg.mxu0
        %v519 = vmax.f32 %v501, 0.0
        %v520 = vmax.f32 %v506, 0.0
        %v521 = vmax.f32 %v511, 0.0
        %v522 = vmax.f32 %v516, 0.0
        %s523 = scalar_lea.vmem [#allocation2], 32
        %v524 = vld [vmem:[%s523] sm:$0xff]
        %v525 = vld [vmem:[%s523 + $0x8] sm:$0xff]
        %v526 = vld [vmem:[%s523 + $0x10] sm:$0xff]
        %v527 = vld [vmem:[%s523 + $0x18] sm:$0xff]
        %s528 = scalar_lea.vmem %s4, 1
        %v529 = vld [vmem:[%s528] sm:$0x1]
        %v531 = vlaneseq
        %v532 = vshrl.u32 %v531, 7
        %v533 = vsub.s32 0, %v532
        %v534 = vrot.slane %v529, %v533
        %v537 = vsel %vm421, %v519, 0
        %v540 = vsel %vm421, %v520, 0
        %v543 = vsel %vm421, %v521, 0
        %v546 = vsel %vm421, %v522, 0
        %548 = vmatprep.subr.mxu0 0.0
        %549 = vmatpush1.msra.mxu0 0.0
        %550 = vmatprep.subr.mxu0 0.0
        %551 = vmatpush1.msra.mxu0 0.0
        %552 = vmatprep.subr.mxu0 0.0
        %553 = vmatpush1.msra.mxu0 0.0
        %554 = vmatprep.subr.mxu0 0.0
        %555 = vmatpush1.msra.mxu0 0.0
        %556 = vmatprep.subr.mxu0 0.0
        %557 = vmatpush1.msra.mxu0 0.0
        %558 = vmatprep.subr.mxu0 0.0
        %559 = vmatpush1.msra.mxu0 0.0
        %560 = vmatprep.subr.mxu0 0.0
        %561 = vmatpush1.msra.mxu0 0.0
        %562 = vmatprep.subr.mxu0 0.0
        %563 = vmatpush1.msra.mxu0 0.0
        %564 = vmatprep.subr.mxu0 0.0
        %565 = vmatpush1.msra.mxu0 0.0
        %566 = vmatprep.subr.mxu0 0.0
        %567 = vmatpush1.msra.mxu0 0.0
        %568 = vmatprep.subr.mxu0 0.0
        %569 = vmatpush1.msra.mxu0 0.0
        %570 = vmatprep.subr.mxu0 0.0
        %571 = vmatpush1.msra.mxu0 0.0
        %572 = vmatprep.subr.mxu0 0.0
        %573 = vmatpush1.msra.mxu0 %v527
        %574 = vmatprep.subr.mxu0 0.0
        %575 = vmatpush1.msra.mxu0 %v526
        %576 = vmatprep.subr.mxu0 0.0
        %577 = vmatpush1.msra.mxu0 %v525
        %578 = vmatprep.subr.mxu0 0.0
        %579 = vmatpush1.msra.mxu0 %v524
        %580 = vmatprep.subr.mxu0 0.0
        %581 = vmatpush2.msra.mxu0 0.0
        %582 = vmatprep.subr.mxu0 0.0
        %583 = vmatpush2.msra.mxu0 0.0
        %584 = vmatprep.subr.mxu0 0.0
        %585 = vmatpush2.msra.mxu0 0.0
        %586 = vmatprep.subr.mxu0 0.0
        %587 = vmatpush2.msra.mxu0 0.0
        %588 = vmatprep.subr.mxu0 0.0
        %589 = vmatpush2.msra.mxu0 0.0
        %590 = vmatprep.subr.mxu0 0.0
        %591 = vmatpush2.msra.mxu0 0.0
        %592 = vmatprep.subr.mxu0 0.0
        %593 = vmatpush2.msra.mxu0 0.0
        %594 = vmatprep.subr.mxu0 0.0
        %595 = vmatpush2.msra.mxu0 0.0
        %596 = vmatprep.subr.mxu0 0.0
        %597 = vmatpush2.msra.mxu0 0.0
        %598 = vmatprep.subr.mxu0 0.0
        %599 = vmatpush2.msra.mxu0 0.0
        %600 = vmatprep.subr.mxu0 0.0
        %601 = vmatpush2.msra.mxu0 0.0
        %602 = vmatprep.subr.mxu0 0.0
        %603 = vmatpush2.msra.mxu0 0.0
        %604 = vmatprep.subr.mxu0 0.0
        %605 = vmatpush2.msra.mxu0 0.0
        %606 = vmatprep.subr.mxu0 0.0
        %607 = vmatpush2.msra.mxu0 0.0
        %608 = vmatprep.subr.mxu0 0.0
        %609 = vmatpush2.msra.mxu0 0.0
        %610 = vmatprep.subr.mxu0 0.0
        %611 = vmatpush2.msra.mxu0 0.0
        %612 = vmatprep.mubr.f32.mxu0 0.0
        %613 = vmatmul.mubr.f32.gmra.mxu0 %v537
        %v614 = vpop.f32.mrf.mxu0
        %v615 = vadd.f32 %v534, %v614
        %v616 = vpop.f32.mrf.mxu0
        %617 = vmatprep.mubr.f32.mxu0 0.0
        %618 = vmatmul.mubr.f32.gmra.mxu0 %v540
        %v619 = vpop.f32.mrf.mxu0
        %v620 = vadd.f32 %v534, %v619
        %v621 = vpop.f32.mrf.mxu0
        %622 = vmatprep.mubr.f32.mxu0 0.0
        %623 = vmatmul.mubr.f32.gmra.mxu0 %v543
        %v624 = vpop.f32.mrf.mxu0
        %v625 = vadd.f32 %v534, %v624
        %v626 = vpop.f32.mrf.mxu0
        %627 = vmatprep.mubr.f32.mxu0 0.0
        %628 = vmatmul.mubr.f32.gmra.mxu0 %v546
        %v629 = vpop.f32.mrf.mxu0
        %v630 = vadd.f32 %v534, %v629
        %v631 = vpop.f32.mrf.mxu0
        %632 = vdwg.mxu0
        %v633 = vmax.f32 %v615, 0.0
        %v634 = vmax.f32 %v620, 0.0
        %v635 = vmax.f32 %v625, 0.0
        %v636 = vmax.f32 %v630, 0.0
        %s637 = scalar_lea.vmem [#allocation2], 64
        %v638 = vld [vmem:[%s637] sm:$0xff]
        %v639 = vld [vmem:[%s637 + $0x8] sm:$0xff]
        %v640 = vld [vmem:[%s637 + $0x10] sm:$0xff]
        %v641 = vld [vmem:[%s637 + $0x18] sm:$0xff]
        %s642 = scalar_lea.vmem %s4, 2
        %v643 = vld [vmem:[%s642] sm:$0x1]
        %v645 = vlaneseq
        %v646 = vshrl.u32 %v645, 7
        %v647 = vsub.s32 0, %v646
        %v648 = vrot.slane %v643, %v647
        %v651 = vsel %vm421, %v633, 0
        %v654 = vsel %vm421, %v634, 0
        %v657 = vsel %vm421, %v635, 0
        %v660 = vsel %vm421, %v636, 0
        %662 = vmatprep.subr.mxu0 0.0
        %663 = vmatpush1.msra.mxu0 0.0
        %664 = vmatprep.subr.mxu0 0.0
        %665 = vmatpush1.msra.mxu0 0.0
        %666 = vmatprep.subr.mxu0 0.0
        %667 = vmatpush1.msra.mxu0 0.0
        %668 = vmatprep.subr.mxu0 0.0
        %669 = vmatpush1.msra.mxu0 0.0
        %670 = vmatprep.subr.mxu0 0.0
        %671 = vmatpush1.msra.mxu0 0.0
        %672 = vmatprep.subr.mxu0 0.0
        %673 = vmatpush1.msra.mxu0 0.0
        %674 = vmatprep.subr.mxu0 0.0
        %675 = vmatpush1.msra.mxu0 0.0
        %676 = vmatprep.subr.mxu0 0.0
        %677 = vmatpush1.msra.mxu0 0.0
        %678 = vmatprep.subr.mxu0 0.0
        %679 = vmatpush1.msra.mxu0 0.0
        %680 = vmatprep.subr.mxu0 0.0
        %681 = vmatpush1.msra.mxu0 0.0
        %682 = vmatprep.subr.mxu0 0.0
        %683 = vmatpush1.msra.mxu0 0.0
        %684 = vmatprep.subr.mxu0 0.0
        %685 = vmatpush1.msra.mxu0 0.0
        %686 = vmatprep.subr.mxu0 0.0
        %687 = vmatpush1.msra.mxu0 %v641
        %688 = vmatprep.subr.mxu0 0.0
        %689 = vmatpush1.msra.mxu0 %v640
        %690 = vmatprep.subr.mxu0 0.0
        %691 = vmatpush1.msra.mxu0 %v639
        %692 = vmatprep.subr.mxu0 0.0
        %693 = vmatpush1.msra.mxu0 %v638
        %694 = vmatprep.subr.mxu0 0.0
        %695 = vmatpush2.msra.mxu0 0.0
        %696 = vmatprep.subr.mxu0 0.0
        %697 = vmatpush2.msra.mxu0 0.0
        %698 = vmatprep.subr.mxu0 0.0
        %699 = vmatpush2.msra.mxu0 0.0
        %700 = vmatprep.subr.mxu0 0.0
        %701 = vmatpush2.msra.mxu0 0.0
        %702 = vmatprep.subr.mxu0 0.0
        %703 = vmatpush2.msra.mxu0 0.0
        %704 = vmatprep.subr.mxu0 0.0
        %705 = vmatpush2.msra.mxu0 0.0
        %706 = vmatprep.subr.mxu0 0.0
        %707 = vmatpush2.msra.mxu0 0.0
        %708 = vmatprep.subr.mxu0 0.0
        %709 = vmatpush2.msra.mxu0 0.0
        %710 = vmatprep.subr.mxu0 0.0
        %711 = vmatpush2.msra.mxu0 0.0
        %712 = vmatprep.subr.mxu0 0.0
        %713 = vmatpush2.msra.mxu0 0.0
        %714 = vmatprep.subr.mxu0 0.0
        %715 = vmatpush2.msra.mxu0 0.0
        %716 = vmatprep.subr.mxu0 0.0
        %717 = vmatpush2.msra.mxu0 0.0
        %718 = vmatprep.subr.mxu0 0.0
        %719 = vmatpush2.msra.mxu0 0.0
        %720 = vmatprep.subr.mxu0 0.0
        %721 = vmatpush2.msra.mxu0 0.0
        %722 = vmatprep.subr.mxu0 0.0
        %723 = vmatpush2.msra.mxu0 0.0
        %724 = vmatprep.subr.mxu0 0.0
        %725 = vmatpush2.msra.mxu0 0.0
        %726 = vmatprep.mubr.f32.mxu0 0.0
        %727 = vmatmul.mubr.f32.gmra.mxu0 %v651
        %v728 = vpop.f32.mrf.mxu0
        %v729 = vadd.f32 %v648, %v728
        %v730 = vpop.f32.mrf.mxu0
        %731 = vmatprep.mubr.f32.mxu0 0.0
        %732 = vmatmul.mubr.f32.gmra.mxu0 %v654
        %v733 = vpop.f32.mrf.mxu0
        %v734 = vadd.f32 %v648, %v733
        %v735 = vpop.f32.mrf.mxu0
        %736 = vmatprep.mubr.f32.mxu0 0.0
        %737 = vmatmul.mubr.f32.gmra.mxu0 %v657
        %v738 = vpop.f32.mrf.mxu0
        %v739 = vadd.f32 %v648, %v738
        %v740 = vpop.f32.mrf.mxu0
        %741 = vmatprep.mubr.f32.mxu0 0.0
        %742 = vmatmul.mubr.f32.gmra.mxu0 %v660
        %v743 = vpop.f32.mrf.mxu0
        %v744 = vadd.f32 %v648, %v743
        %v745 = vpop.f32.mrf.mxu0
        %746 = vdwg.mxu0
        %v747 = vmax.f32 %v729, 0.0
        %v748 = vmax.f32 %v734, 0.0
        %v749 = vmax.f32 %v739, 0.0
        %v750 = vmax.f32 %v744, 0.0
        %s751 = scalar_lea.vmem [#allocation2], 96
        %v752 = vld [vmem:[%s751] sm:$0xff]
        %v753 = vld [vmem:[%s751 + $0x8] sm:$0xff]
        %v754 = vld [vmem:[%s751 + $0x10] sm:$0xff]
        %v755 = vld [vmem:[%s751 + $0x18] sm:$0xff]
        %s756 = scalar_lea.vmem %s4, 3
        %v757 = vld [vmem:[%s756] sm:$0x1]
        %v759 = vlaneseq
        %v760 = vshrl.u32 %v759, 7
        %v761 = vsub.s32 0, %v760
        %v762 = vrot.slane %v757, %v761
        %v765 = vsel %vm421, %v747, 0
        %v768 = vsel %vm421, %v748, 0
        %v771 = vsel %vm421, %v749, 0
        %v774 = vsel %vm421, %v750, 0
        %776 = vmatprep.subr.mxu0 0.0
        %777 = vmatpush1.msra.mxu0 0.0
        %778 = vmatprep.subr.mxu0 0.0
        %779 = vmatpush1.msra.mxu0 0.0
        %780 = vmatprep.subr.mxu0 0.0
        %781 = vmatpush1.msra.mxu0 0.0
        %782 = vmatprep.subr.mxu0 0.0
        %783 = vmatpush1.msra.mxu0 0.0
        %784 = vmatprep.subr.mxu0 0.0
        %785 = vmatpush1.msra.mxu0 0.0
        %786 = vmatprep.subr.mxu0 0.0
        %787 = vmatpush1.msra.mxu0 0.0
        %788 = vmatprep.subr.mxu0 0.0
        %789 = vmatpush1.msra.mxu0 0.0
        %790 = vmatprep.subr.mxu0 0.0
        %791 = vmatpush1.msra.mxu0 0.0
        %792 = vmatprep.subr.mxu0 0.0
        %793 = vmatpush1.msra.mxu0 0.0
        %794 = vmatprep.subr.mxu0 0.0
        %795 = vmatpush1.msra.mxu0 0.0
        %796 = vmatprep.subr.mxu0 0.0
        %797 = vmatpush1.msra.mxu0 0.0
        %798 = vmatprep.subr.mxu0 0.0
        %799 = vmatpush1.msra.mxu0 0.0
        %800 = vmatprep.subr.mxu0 0.0
        %801 = vmatpush1.msra.mxu0 %v755
        %802 = vmatprep.subr.mxu0 0.0
        %803 = vmatpush1.msra.mxu0 %v754
        %804 = vmatprep.subr.mxu0 0.0
        %805 = vmatpush1.msra.mxu0 %v753
        %806 = vmatprep.subr.mxu0 0.0
        %807 = vmatpush1.msra.mxu0 %v752
        %808 = vmatprep.subr.mxu0 0.0
        %809 = vmatpush2.msra.mxu0 0.0
        %810 = vmatprep.subr.mxu0 0.0
        %811 = vmatpush2.msra.mxu0 0.0
        %812 = vmatprep.subr.mxu0 0.0
        %813 = vmatpush2.msra.mxu0 0.0
        %814 = vmatprep.subr.mxu0 0.0
        %815 = vmatpush2.msra.mxu0 0.0
        %816 = vmatprep.subr.mxu0 0.0
        %817 = vmatpush2.msra.mxu0 0.0
        %818 = vmatprep.subr.mxu0 0.0
        %819 = vmatpush2.msra.mxu0 0.0
        %820 = vmatprep.subr.mxu0 0.0
        %821 = vmatpush2.msra.mxu0 0.0
        %822 = vmatprep.subr.mxu0 0.0
        %823 = vmatpush2.msra.mxu0 0.0
        %824 = vmatprep.subr.mxu0 0.0
        %825 = vmatpush2.msra.mxu0 0.0
        %826 = vmatprep.subr.mxu0 0.0
        %827 = vmatpush2.msra.mxu0 0.0
        %828 = vmatprep.subr.mxu0 0.0
        %829 = vmatpush2.msra.mxu0 0.0
        %830 = vmatprep.subr.mxu0 0.0
        %831 = vmatpush2.msra.mxu0 0.0
        %832 = vmatprep.subr.mxu0 0.0
        %833 = vmatpush2.msra.mxu0 0.0
        %834 = vmatprep.subr.mxu0 0.0
        %835 = vmatpush2.msra.mxu0 0.0
        %836 = vmatprep.subr.mxu0 0.0
        %837 = vmatpush2.msra.mxu0 0.0
        %838 = vmatprep.subr.mxu0 0.0
        %839 = vmatpush2.msra.mxu0 0.0
        %840 = vmatprep.mubr.f32.mxu0 0.0
        %841 = vmatmul.mubr.f32.gmra.mxu0 %v765
        %v842 = vpop.f32.mrf.mxu0
        %v843 = vadd.f32 %v762, %v842
        %v844 = vpop.f32.mrf.mxu0
        %845 = vmatprep.mubr.f32.mxu0 0.0
        %846 = vmatmul.mubr.f32.gmra.mxu0 %v768
        %v847 = vpop.f32.mrf.mxu0
        %v848 = vadd.f32 %v762, %v847
        %v849 = vpop.f32.mrf.mxu0
        %850 = vmatprep.mubr.f32.mxu0 0.0
        %851 = vmatmul.mubr.f32.gmra.mxu0 %v771
        %v852 = vpop.f32.mrf.mxu0
        %v853 = vadd.f32 %v762, %v852
        %v854 = vpop.f32.mrf.mxu0
        %855 = vmatprep.mubr.f32.mxu0 0.0
        %856 = vmatmul.mubr.f32.gmra.mxu0 %v774
        %v857 = vpop.f32.mrf.mxu0
        %v858 = vadd.f32 %v762, %v857
        %v859 = vpop.f32.mrf.mxu0
        %860 = vdwg.mxu0
        %v861 = vmax.f32 %v843, 0.0
        %v862 = vmax.f32 %v848, 0.0
        %v863 = vmax.f32 %v853, 0.0
        %v864 = vmax.f32 %v858, 0.0
        %s865 = scalar_lea.vmem [#allocation2], 128
        %v866 = vld [vmem:[%s865] sm:$0xff]
        %v867 = vld [vmem:[%s865 + $0x8] sm:$0xff]
        %v868 = vld [vmem:[%s865 + $0x10] sm:$0xff]
        %v869 = vld [vmem:[%s865 + $0x18] sm:$0xff]
        %s870 = scalar_lea.vmem %s4, 4
        %v871 = vld [vmem:[%s870] sm:$0x1]
        %v873 = vlaneseq
        %v874 = vshrl.u32 %v873, 7
        %v875 = vsub.s32 0, %v874
        %v876 = vrot.slane %v871, %v875
        %v879 = vsel %vm421, %v861, 0
        %v882 = vsel %vm421, %v862, 0
        %v885 = vsel %vm421, %v863, 0
        %v888 = vsel %vm421, %v864, 0
        %890 = vmatprep.subr.mxu0 0.0
        %891 = vmatpush1.msra.mxu0 0.0
        %892 = vmatprep.subr.mxu0 0.0
        %893 = vmatpush1.msra.mxu0 0.0
        %894 = vmatprep.subr.mxu0 0.0
        %895 = vmatpush1.msra.mxu0 0.0
        %896 = vmatprep.subr.mxu0 0.0
        %897 = vmatpush1.msra.mxu0 0.0
        %898 = vmatprep.subr.mxu0 0.0
        %899 = vmatpush1.msra.mxu0 0.0
        %900 = vmatprep.subr.mxu0 0.0
        %901 = vmatpush1.msra.mxu0 0.0
        %902 = vmatprep.subr.mxu0 0.0
        %903 = vmatpush1.msra.mxu0 0.0
        %904 = vmatprep.subr.mxu0 0.0
        %905 = vmatpush1.msra.mxu0 0.0
        %906 = vmatprep.subr.mxu0 0.0
        %907 = vmatpush1.msra.mxu0 0.0
        %908 = vmatprep.subr.mxu0 0.0
        %909 = vmatpush1.msra.mxu0 0.0
        %910 = vmatprep.subr.mxu0 0.0
        %911 = vmatpush1.msra.mxu0 0.0
        %912 = vmatprep.subr.mxu0 0.0
        %913 = vmatpush1.msra.mxu0 0.0
        %914 = vmatprep.subr.mxu0 0.0
        %915 = vmatpush1.msra.mxu0 %v869
        %916 = vmatprep.subr.mxu0 0.0
        %917 = vmatpush1.msra.mxu0 %v868
        %918 = vmatprep.subr.mxu0 0.0
        %919 = vmatpush1.msra.mxu0 %v867
        %920 = vmatprep.subr.mxu0 0.0
        %921 = vmatpush1.msra.mxu0 %v866
        %922 = vmatprep.subr.mxu0 0.0
        %923 = vmatpush2.msra.mxu0 0.0
        %924 = vmatprep.subr.mxu0 0.0
        %925 = vmatpush2.msra.mxu0 0.0
        %926 = vmatprep.subr.mxu0 0.0
        %927 = vmatpush2.msra.mxu0 0.0
        %928 = vmatprep.subr.mxu0 0.0
        %929 = vmatpush2.msra.mxu0 0.0
        %930 = vmatprep.subr.mxu0 0.0
        %931 = vmatpush2.msra.mxu0 0.0
        %932 = vmatprep.subr.mxu0 0.0
        %933 = vmatpush2.msra.mxu0 0.0
        %934 = vmatprep.subr.mxu0 0.0
        %935 = vmatpush2.msra.mxu0 0.0
        %936 = vmatprep.subr.mxu0 0.0
        %937 = vmatpush2.msra.mxu0 0.0
        %938 = vmatprep.subr.mxu0 0.0
        %939 = vmatpush2.msra.mxu0 0.0
        %940 = vmatprep.subr.mxu0 0.0
        %941 = vmatpush2.msra.mxu0 0.0
        %942 = vmatprep.subr.mxu0 0.0
        %943 = vmatpush2.msra.mxu0 0.0
        %944 = vmatprep.subr.mxu0 0.0
        %945 = vmatpush2.msra.mxu0 0.0
        %946 = vmatprep.subr.mxu0 0.0
        %947 = vmatpush2.msra.mxu0 0.0
        %948 = vmatprep.subr.mxu0 0.0
        %949 = vmatpush2.msra.mxu0 0.0
        %950 = vmatprep.subr.mxu0 0.0
        %951 = vmatpush2.msra.mxu0 0.0
        %952 = vmatprep.subr.mxu0 0.0
        %953 = vmatpush2.msra.mxu0 0.0
        %954 = vmatprep.mubr.f32.mxu0 0.0
        %955 = vmatmul.mubr.f32.gmra.mxu0 %v879
        %v956 = vpop.f32.mrf.mxu0
        %v957 = vadd.f32 %v876, %v956
        %v958 = vpop.f32.mrf.mxu0
        %959 = vmatprep.mubr.f32.mxu0 0.0
        %960 = vmatmul.mubr.f32.gmra.mxu0 %v882
        %v961 = vpop.f32.mrf.mxu0
        %v962 = vadd.f32 %v876, %v961
        %v963 = vpop.f32.mrf.mxu0
        %964 = vmatprep.mubr.f32.mxu0 0.0
        %965 = vmatmul.mubr.f32.gmra.mxu0 %v885
        %v966 = vpop.f32.mrf.mxu0
        %v967 = vadd.f32 %v876, %v966
        %v968 = vpop.f32.mrf.mxu0
        %969 = vmatprep.mubr.f32.mxu0 0.0
        %970 = vmatmul.mubr.f32.gmra.mxu0 %v888
        %v971 = vpop.f32.mrf.mxu0
        %v972 = vadd.f32 %v876, %v971
        %v973 = vpop.f32.mrf.mxu0
        %974 = vdwg.mxu0
        %v975 = vmax.f32 %v957, 0.0
        %v976 = vmax.f32 %v962, 0.0
        %v977 = vmax.f32 %v967, 0.0
        %v978 = vmax.f32 %v972, 0.0
        %v979 = vld [vmem:[%s5] sm:$0xff]
        %v980 = vld [vmem:[%s5 + $0x8] sm:$0xff]
        %v981 = vld [vmem:[%s5 + $0x10] sm:$0xff]
        %v982 = vld [vmem:[%s5 + $0x18] sm:$0xff]
        %v983 = vld [vmem:[%s6] sm:$0x1]
        %v985 = vlaneseq
        %v986 = vshrl.u32 %v985, 7
        %v987 = vsub.s32 0, %v986
        %v988 = vrot.slane %v983, %v987
        %v991 = vsel %vm421, %v975, 0
        %v994 = vsel %vm421, %v976, 0
        %v997 = vsel %vm421, %v977, 0
        %v1000 = vsel %vm421, %v978, 0
        %1002 = vmatprep.subr.mxu0 0.0
        %1003 = vmatpush1.msra.mxu0 0.0
        %1004 = vmatprep.subr.mxu0 0.0
        %1005 = vmatpush1.msra.mxu0 0.0
        %1006 = vmatprep.subr.mxu0 0.0
        %1007 = vmatpush1.msra.mxu0 0.0
        %1008 = vmatprep.subr.mxu0 0.0
        %1009 = vmatpush1.msra.mxu0 0.0
        %1010 = vmatprep.subr.mxu0 0.0
        %1011 = vmatpush1.msra.mxu0 0.0
        %1012 = vmatprep.subr.mxu0 0.0
        %1013 = vmatpush1.msra.mxu0 0.0
        %1014 = vmatprep.subr.mxu0 0.0
        %1015 = vmatpush1.msra.mxu0 0.0
        %1016 = vmatprep.subr.mxu0 0.0
        %1017 = vmatpush1.msra.mxu0 0.0
        %1018 = vmatprep.subr.mxu0 0.0
        %1019 = vmatpush1.msra.mxu0 0.0
        %1020 = vmatprep.subr.mxu0 0.0
        %1021 = vmatpush1.msra.mxu0 0.0
        %1022 = vmatprep.subr.mxu0 0.0
        %1023 = vmatpush1.msra.mxu0 0.0
        %1024 = vmatprep.subr.mxu0 0.0
        %1025 = vmatpush1.msra.mxu0 0.0
        %1026 = vmatprep.subr.mxu0 0.0
        %1027 = vmatpush1.msra.mxu0 %v982
        %1028 = vmatprep.subr.mxu0 0.0
        %1029 = vmatpush1.msra.mxu0 %v981
        %1030 = vmatprep.subr.mxu0 0.0
        %1031 = vmatpush1.msra.mxu0 %v980
        %1032 = vmatprep.subr.mxu0 0.0
        %1033 = vmatpush1.msra.mxu0 %v979
        %1034 = vmatprep.subr.mxu0 0.0
        %1035 = vmatpush2.msra.mxu0 0.0
        %1036 = vmatprep.subr.mxu0 0.0
        %1037 = vmatpush2.msra.mxu0 0.0
        %1038 = vmatprep.subr.mxu0 0.0
        %1039 = vmatpush2.msra.mxu0 0.0
        %1040 = vmatprep.subr.mxu0 0.0
        %1041 = vmatpush2.msra.mxu0 0.0
        %1042 = vmatprep.subr.mxu0 0.0
        %1043 = vmatpush2.msra.mxu0 0.0
        %1044 = vmatprep.subr.mxu0 0.0
        %1045 = vmatpush2.msra.mxu0 0.0
        %1046 = vmatprep.subr.mxu0 0.0
        %1047 = vmatpush2.msra.mxu0 0.0
        %1048 = vmatprep.subr.mxu0 0.0
        %1049 = vmatpush2.msra.mxu0 0.0
        %1050 = vmatprep.subr.mxu0 0.0
        %1051 = vmatpush2.msra.mxu0 0.0
        %1052 = vmatprep.subr.mxu0 0.0
        %1053 = vmatpush2.msra.mxu0 0.0
        %1054 = vmatprep.subr.mxu0 0.0
        %1055 = vmatpush2.msra.mxu0 0.0
        %1056 = vmatprep.subr.mxu0 0.0
        %1057 = vmatpush2.msra.mxu0 0.0
        %1058 = vmatprep.subr.mxu0 0.0
        %1059 = vmatpush2.msra.mxu0 0.0
        %1060 = vmatprep.subr.mxu0 0.0
        %1061 = vmatpush2.msra.mxu0 0.0
        %1062 = vmatprep.subr.mxu0 0.0
        %1063 = vmatpush2.msra.mxu0 0.0
        %1064 = vmatprep.subr.mxu0 0.0
        %1065 = vmatpush2.msra.mxu0 0.0
        %1066 = vmatprep.mubr.f32.mxu0 0.0
        %1067 = vmatmul.mubr.f32.gmra.mxu0 %v991
        %v1068 = vpop.f32.mrf.mxu0
        %v1069 = vadd.f32 %v988, %v1068
        %v1070 = vpop.f32.mrf.mxu0
        %1071 = vmatprep.mubr.f32.mxu0 0.0
        %1072 = vmatmul.mubr.f32.gmra.mxu0 %v994
        %v1073 = vpop.f32.mrf.mxu0
        %v1074 = vadd.f32 %v988, %v1073
        %v1075 = vpop.f32.mrf.mxu0
        %1076 = vmatprep.mubr.f32.mxu0 0.0
        %1077 = vmatmul.mubr.f32.gmra.mxu0 %v997
        %v1078 = vpop.f32.mrf.mxu0
        %v1079 = vadd.f32 %v988, %v1078
        %v1080 = vpop.f32.mrf.mxu0
        %1081 = vmatprep.mubr.f32.mxu0 0.0
        %1082 = vmatmul.mubr.f32.gmra.mxu0 %v1000
        %v1083 = vpop.f32.mrf.mxu0
        %v1084 = vadd.f32 %v988, %v1083
        %v1085 = vpop.f32.mrf.mxu0
        %1086 = vdwg.mxu0
        %1087 = vst [vmem:[%s287] sm:$0xff] %v1069
        %1088 = vst [vmem:[%s287 + $0x8] sm:$0xff] %v1074
        %1089 = vst [vmem:[%s287 + $0x10] sm:$0xff] %v1079
        %1090 = vst [vmem:[%s287 + $0x18] sm:$0xff] %v1084
        %s1091 = sand.u32 %s182, 1
        %s1092 = scalar_lea.sflag [#allocation4], %s1091
        %s1093 = sand.u32 %s182, 1
        %s1094 = smul.addr %s1093, 32
        %s1095 = scalar_lea.vmem [#allocation5], %s1094
        // Predicated region
        $region53: #{tpu_custom_call.1} parent=47 // pred_check
          %p1096 = pneg %p192
        $region54: #{tpu_custom_call.1} parent=47 // pred_check_branch
          %1098 = sbr.rel (%p1096) target = $region56
        $region55: #{tpu_custom_call.1} parent=47 // pred_region
          %s1099 = smul.u32 4, %s22
          %s1101 = ssub.s32 512, 512
          %1102 = vsyncadd %s1092, %s1101
          %s1103 = smul.addr %s1099, 128
          %s1104 = scalar_lea.hbm %s7, %s1103
          %s1105 = sshll.u32 %s1095, 4
          %s1106 = int_to_ptr.vmem [resolvable:$true] %s1105
          %1111 = dma.vmem_to_hbm [thread:$0]  %s1106, 512, %s1104, %s1092, 128, 128, 8
        $region56: #{tpu_custom_call.1} parent=47 // pred_fallthru
          _
      $region48: #{tpu_custom_call.1} parent=5 // pred_fallthru
        _
      %p1112 = scmp.le.s32.totalorder 2, %s17
      // Predicated region
      $region57: #{tpu_custom_call.1} parent=5 // pred_check
        %p1113 = pneg %p1112
      $region58: #{tpu_custom_call.1} parent=5 // pred_check_branch
        %1115 = sbr.rel (%p1113) target = $region60
      $region59: #{tpu_custom_call.1} parent=5 // pred_region
        %s1116 = ssub.s32 %s17, 2
        // Predicated region
        $region61: #{tpu_custom_call.1} parent=59 // pred_check
          %p1117 = pneg %p198
        $region62: #{tpu_custom_call.1} parent=59 // pred_check_branch
          %1119 = sbr.rel (%p1117) target = $region64
        $region63: #{tpu_custom_call.1} parent=59 // pred_region
          %s1120 = sand.u32 %s183, 1
          %s1121 = scalar_lea.sflag [#allocation4], %s1120
          %s1122 = sand.u32 %s183, 1
          %s1123 = smul.addr %s1122, 32
          %s1124 = scalar_lea.vmem [#allocation5], %s1123
          %1125 = dma.done %s1121, 512
        $region64: #{tpu_custom_call.1} parent=59 // pred_fallthru
          _
      $region60: #{tpu_custom_call.1} parent=5 // pred_fallthru
        _
    $region6: #{tpu_custom_call.1} parent=1 // loop_footer
      %s21 = sadd.s32 1, %s17
    $region7: #{tpu_custom_call.1} parent=1 // loop_footer_branch
      %16 = sbr.rel target = $region3
    $region8: #{tpu_custom_call.1} parent=1 // loop_exit
      _
    %1126 = vsyncpa [#allocation3], 1
    %s1127 = scalar_lea.sflag [#allocation3], 1
    %1128 = vsyncpa %s1127, 1
    %1129 = vsyncpa [#allocation4], 1
    %s1130 = scalar_lea.sflag [#allocation4], 1
    %1131 = vsyncpa %s1130, 1

</llo_original>
